<compile_context>
chip_gen: v7x
topology: tpu7x:2x2x1
jax: 0.10.0
libtpu: 0.0.40
codegen_flags: <defaults>
</compile_context>

<pallas_src>
import functools

import jax
import jax.numpy as jnp
from jax.experimental import pallas as pl
from jax.experimental.pallas import tpu as pltpu

HIDDEN = 128


def _round_up(x, m):
    return ((x + m - 1) // m) * m


def _policy_net_kernel(x_ref, w1_ref, w2_ref, w3_ref, b_ref, o_ref, *, n_act):
    # Packed f32 bias slab along the lane axis: [ b1 (128) | b2 (128) | b3 (n_act) ]
    # (all slice starts are 128-lane-tile aligned -> cheap VMEM views).
    b1 = b_ref[:, 0:HIDDEN]
    b2 = b_ref[:, HIDDEN:2 * HIDDEN]
    b3 = b_ref[:, 2 * HIDDEN:2 * HIDDEN + n_act]

    # Matmuls at the weights' dtype (bf16 fast path / f32 exact path), f32 MXU
    # accumulation; bias-add + ReLU epilogue stays f32 on the VPU (free slack).
    x = x_ref[...].astype(w1_ref.dtype)
    h1 = jnp.dot(x, w1_ref[...], preferred_element_type=jnp.float32)
    h1 = jnp.maximum(h1 + b1, 0.0)
    h2 = jnp.dot(h1.astype(w2_ref.dtype), w2_ref[...],
                 preferred_element_type=jnp.float32)
    h2 = jnp.maximum(h2 + b2, 0.0)
    out = jnp.dot(h2.astype(w3_ref.dtype), w3_ref[...],
                  preferred_element_type=jnp.float32)
    o_ref[...] = (out + b3).astype(o_ref.dtype)


def prepare_policy_net_params(params, *, use_bf16=True):
    """One-time layout plumbing (do this at init / after each optimizer step).

    Weights are stored [in_features, out_features] so the kernel computes
    x @ W + b (== PyTorch x @ W.T + b with W of shape [out, in]).
    """
    wdt = jnp.bfloat16 if use_bf16 else jnp.float32
    b_slab = jnp.concatenate(
        [params["b1"], params["b2"], params["b3"]], axis=1).astype(jnp.float32)
    return {
        "w1": params["w1"].astype(wdt),
        "w2": params["w2"].astype(wdt),
        "w3": params["w3"].astype(wdt),
        "b_slab": b_slab,
        "n_obs": int(params["w1"].shape[0]),
        "n_act": int(params["w3"].shape[1]),
    }


def policy_net_forward(x, prepared, *, block_b=1024, single_step_max_b=2048):
    """x: [B, n_observations] float32; prepared: output of prepare_policy_net_params."""
    B, n_obs = x.shape
    assert n_obs == prepared["n_obs"], (n_obs, prepared["n_obs"])
    n_act = prepared["n_act"]
    w1, w2, w3, b_slab = (prepared["w1"], prepared["w2"],
                          prepared["w3"], prepared["b_slab"])

    if B <= single_step_max_b:
        # Single grid step, full-array blocks: no padding of x, no pipeline overhead.
        tb, b_pad, x_p = B, B, x
    else:
        # Throughput path: large batch tiles amortize the ~0.35 us/step cost.
        tb = block_b
        b_pad = _round_up(B, tb)
        x_p = x if b_pad == B else jnp.pad(x, ((0, b_pad - B), (0, 0)))
    grid = (b_pad // tb,)

    # Weights / packed bias slab: constant block index -> resident in VMEM.
    const = lambda a: pl.BlockSpec(a.shape, lambda i: (0, 0))

    flops = 2 * b_pad * (n_obs * HIDDEN + HIDDEN * HIDDEN + HIDDEN * n_act)
    bytes_accessed = (x_p.size * x_p.dtype.itemsize
                      + w1.size * w1.dtype.itemsize
                      + w2.size * w2.dtype.itemsize
                      + w3.size * w3.dtype.itemsize
                      + b_slab.size * b_slab.dtype.itemsize
                      + b_pad * n_act * 4)

    out_p = pl.pallas_call(
        functools.partial(_policy_net_kernel, n_act=n_act),
        out_shape=jax.ShapeDtypeStruct((b_pad, n_act), jnp.float32),
        grid_spec=pltpu.PrefetchScalarGridSpec(
            num_scalar_prefetch=0,
            grid=grid,
            in_specs=[
                pl.BlockSpec((tb, n_obs), lambda i: (i, 0)),   # x: tiled over batch
                const(w1),                                     # resident weights
                const(w2),
                const(w3),
                const(b_slab),                                 # packed biases
            ],
            out_specs=pl.BlockSpec((tb, n_act), lambda i: (i, 0)),
        ),
        compiler_params=pltpu.CompilerParams(
            dimension_semantics=("parallel",),      # megacore sharding on v7x
            vmem_limit_bytes=32 * 1024 * 1024,      # safe on v5e/v6e/v7x
        ),
        cost_estimate=pl.CostEstimate(
            flops=flops, transcendentals=0, bytes_accessed=bytes_accessed),
    )(x_p, w1, w2, w3, b_slab)

    return out_p if b_pad == B else out_p[:B]


def init_policy_net_params(key, n_observations, n_actions, hidden=HIDDEN):
    """Deterministic init mimicking PyTorch Linear default U(-1/sqrt(fan_in), 1/sqrt(fan_in))."""
    ks = jax.random.split(key, 6)

    def uniform(k, shape, fan_in):
        bound = 1.0 / jnp.sqrt(jnp.float32(fan_in))
        return jax.random.uniform(k, shape, jnp.float32, -bound, bound)

    return {
        "w1": uniform(ks[0], (n_observations, hidden), n_observations),
        "b1": uniform(ks[1], (1, hidden), n_observations),
        "w2": uniform(ks[2], (hidden, hidden), hidden),
        "b2": uniform(ks[3], (1, hidden), hidden),
        "w3": uniform(ks[4], (hidden, n_actions), hidden),
        "b3": uniform(ks[5], (1, n_actions), hidden),
    }


def policy_net_ref(x, params):
    """Pure-JAX f32 reference for correctness checking."""
    h1 = jnp.maximum(x @ params["w1"] + params["b1"], 0.0)
    h2 = jnp.maximum(h1 @ params["w2"] + params["b2"], 0.0)
    return h2 @ params["w3"] + params["b3"]


if __name__ == "__main__":
    n_observations = 32
    n_actions = 8
    batch = 8

    key = jax.random.PRNGKey(0)
    k_params, k_x = jax.random.split(key)

    params = init_policy_net_params(k_params, n_observations, n_actions)
    x = jax.random.normal(k_x, (batch, n_observations), dtype=jnp.float32)
    ref = policy_net_ref(x, params)

    # f32 path: bit-faithful to the PyTorch fp32 module (single grid step).
    prep_f32 = prepare_policy_net_params(params, use_bf16=False)
    out_f32 = jax.block_until_ready(policy_net_forward(x, prep_f32))
    assert out_f32.shape == (batch, n_actions), out_f32.shape
    assert jnp.allclose(out_f32, ref, atol=1e-4, rtol=1e-4), "f32 mismatch vs reference"

    # bf16 matmul path: MXU-native on v6e/v7x, f32 epilogue (looser tolerance).
    prep_bf16 = prepare_policy_net_params(params, use_bf16=True)
    out_bf16 = jax.block_until_ready(policy_net_forward(x, prep_bf16))
    assert out_bf16.shape == (batch, n_actions), out_bf16.shape
    assert jnp.allclose(out_bf16, ref, atol=5e-2, rtol=5e-2), "bf16 mismatch vs reference"

    # Batch-tiled throughput path (grid > 1, padded last tile), f32 for a tight check.
    big_b = 600
    xb = jax.random.normal(jax.random.PRNGKey(1), (big_b, n_observations), jnp.float32)
    out_big = jax.block_until_ready(
        policy_net_forward(xb, prep_f32, block_b=256, single_step_max_b=256))
    ref_big = policy_net_ref(xb, params)
    assert out_big.shape == (big_b, n_actions), out_big.shape
    assert jnp.allclose(out_big, ref_big, atol=1e-4, rtol=1e-4), "tiled mismatch"

    print("KERNEL_OK")
</pallas_src>

<mosaic_0001>
module attributes {stable_mosaic.version = 11 : i64} {
  func.func @_policy_net_kernel(%arg0: i32, %arg1: memref<8x32xf32, #tpu.memory_space<vmem>>, %arg2: memref<32x128xf32, #tpu.memory_space<vmem>>, %arg3: memref<128x128xf32, #tpu.memory_space<vmem>>, %arg4: memref<128x8xf32, #tpu.memory_space<vmem>>, %arg5: memref<1x264xf32, #tpu.memory_space<vmem>>, %arg6: memref<8x8xf32, #tpu.memory_space<vmem>>) attributes {dimension_semantics = [#tpu.dimension_semantics<parallel>], iteration_bounds = array<i64: 1>, scalar_prefetch = 0 : i64, scratch_operands = 0 : i64, tpu.core_type = #tpu.core_type<tc>, window_params = [{transform_indices = @transform_0, window_bounds = array<i64: 8, 32>}, {pipeline_mode = #tpu.pipeline_mode<synchronous>, transform_indices = @transform_1, window_bounds = array<i64: 32, 128>}, {pipeline_mode = #tpu.pipeline_mode<synchronous>, transform_indices = @transform_2, window_bounds = array<i64: 128, 128>}, {pipeline_mode = #tpu.pipeline_mode<synchronous>, transform_indices = @transform_3, window_bounds = array<i64: 128, 8>}, {pipeline_mode = #tpu.pipeline_mode<synchronous>, transform_indices = @transform_4, window_bounds = array<i64: 1, 264>}, {transform_indices = @transform_5, window_bounds = array<i64: 8, 8>}]} {
    %c0 = arith.constant 0 : index
    %c0_0 = arith.constant 0 : index
    %0 = vector.load %arg5[%c0, %c0_0] : memref<1x264xf32, #tpu.memory_space<vmem>>, vector<1x128xf32>
    %c0_1 = arith.constant 0 : index
    %c128 = arith.constant 128 : index
    %1 = vector.load %arg5[%c0_1, %c128] : memref<1x264xf32, #tpu.memory_space<vmem>>, vector<1x128xf32>
    %c0_2 = arith.constant 0 : index
    %c256 = arith.constant 256 : index
    %2 = vector.load %arg5[%c0_2, %c256] : memref<1x264xf32, #tpu.memory_space<vmem>>, vector<1x8xf32>
    %c0_3 = arith.constant 0 : index
    %c0_4 = arith.constant 0 : index
    %3 = vector.load %arg1[%c0_3, %c0_4] : memref<8x32xf32, #tpu.memory_space<vmem>>, vector<8x32xf32>
    %c0_5 = arith.constant 0 : index
    %c0_6 = arith.constant 0 : index
    %4 = vector.load %arg2[%c0_5, %c0_6] : memref<32x128xf32, #tpu.memory_space<vmem>>, vector<32x128xf32>
    %cst = arith.constant dense<0.000000e+00> : vector<8x128xf32>
    %5 = tpu.matmul %3, %4, %cst {dimension_numbers = #tpu.dot_dimension_numbers<[1], [0], [0], [1], [0, 0, 1, 1], [], []>} : vector<8x32xf32>, vector<32x128xf32>, vector<8x128xf32> -> vector<8x128xf32>
    %6 = vector.broadcast %0 : vector<1x128xf32> to vector<8x128xf32>
    %7 = arith.addf %5, %6 : vector<8x128xf32>
    %cst_7 = arith.constant 0.000000e+00 : f32
    %8 = vector.broadcast %cst_7 : f32 to vector<8x128xf32>
    %9 = arith.maximumf %7, %8 : vector<8x128xf32>
    %c0_8 = arith.constant 0 : index
    %c0_9 = arith.constant 0 : index
    %10 = vector.load %arg3[%c0_8, %c0_9] : memref<128x128xf32, #tpu.memory_space<vmem>>, vector<128x128xf32>
    %cst_10 = arith.constant dense<0.000000e+00> : vector<8x128xf32>
    %11 = tpu.matmul %9, %10, %cst_10 {dimension_numbers = #tpu.dot_dimension_numbers<[1], [0], [0], [1], [0, 0, 1, 1], [], []>} : vector<8x128xf32>, vector<128x128xf32>, vector<8x128xf32> -> vector<8x128xf32>
    %12 = vector.broadcast %1 : vector<1x128xf32> to vector<8x128xf32>
    %13 = arith.addf %11, %12 : vector<8x128xf32>
    %cst_11 = arith.constant 0.000000e+00 : f32
    %14 = vector.broadcast %cst_11 : f32 to vector<8x128xf32>
    %15 = arith.maximumf %13, %14 : vector<8x128xf32>
    %c0_12 = arith.constant 0 : index
    %c0_13 = arith.constant 0 : index
    %16 = vector.load %arg4[%c0_12, %c0_13] : memref<128x8xf32, #tpu.memory_space<vmem>>, vector<128x8xf32>
    %cst_14 = arith.constant dense<0.000000e+00> : vector<8x8xf32>
    %17 = tpu.matmul %15, %16, %cst_14 {dimension_numbers = #tpu.dot_dimension_numbers<[1], [0], [0], [1], [0, 0, 1, 1], [], []>} : vector<8x128xf32>, vector<128x8xf32>, vector<8x8xf32> -> vector<8x8xf32>
    %18 = vector.broadcast %2 : vector<1x8xf32> to vector<8x8xf32>
    %19 = arith.addf %17, %18 : vector<8x8xf32>
    %c0_15 = arith.constant 0 : index
    %c0_16 = arith.constant 0 : index
    %20 = vector.load %arg6[%c0_15, %c0_16] : memref<8x8xf32, #tpu.memory_space<vmem>>, vector<8x8xf32>
    tpu.vector_store %arg6[%c0_15, %c0_16], %19 {strides = array<i32>} : memref<8x8xf32, #tpu.memory_space<vmem>>, vector<8x8xf32>,
    return
  }
  func.func @transform_0(%arg0: i32) -> (i32, i32) {
    %c0_i32 = arith.constant 0 : i32
    %c0_i32_0 = arith.constant 0 : i32
    return %arg0, %c0_i32 : i32, i32
  }
  func.func @transform_1(%arg0: i32) -> (i32, i32) {
    %c0_i32 = arith.constant 0 : i32
    %c0_i32_0 = arith.constant 0 : i32
    %c0_i32_1 = arith.constant 0 : i32
    return %c0_i32, %c0_i32_0 : i32, i32
  }
  func.func @transform_2(%arg0: i32) -> (i32, i32) {
    %c0_i32 = arith.constant 0 : i32
    %c0_i32_0 = arith.constant 0 : i32
    %c0_i32_1 = arith.constant 0 : i32
    return %c0_i32, %c0_i32_0 : i32, i32
  }
  func.func @transform_3(%arg0: i32) -> (i32, i32) {
    %c0_i32 = arith.constant 0 : i32
    %c0_i32_0 = arith.constant 0 : i32
    %c0_i32_1 = arith.constant 0 : i32
    return %c0_i32, %c0_i32_0 : i32, i32
  }
  func.func @transform_4(%arg0: i32) -> (i32, i32) {
    %c0_i32 = arith.constant 0 : i32
    %c0_i32_0 = arith.constant 0 : i32
    %c0_i32_1 = arith.constant 0 : i32
    return %c0_i32, %c0_i32_0 : i32, i32
  }
  func.func @transform_5(%arg0: i32) -> (i32, i32) {
    %c0_i32 = arith.constant 0 : i32
    %c0_i32_0 = arith.constant 0 : i32
    return %arg0, %c0_i32 : i32, i32
  }
}

</mosaic_0001>

<llo_original>
// kernel: tpu_custom_call.1
$region0: #{tpu_custom_call.1}
  #allocation0 [shape = 'u32[]', space=smem, size = 0x4, offset = 0x4, fixed_abs, tag = 'smem constant byte address 0x4 - core index']
  #allocation1 [shape = 'u32[144,128]{1,0:T(1,128)}', space=vmem, size = 0x12000, scoped, tag = 'internal scratch']
  %s0 = inlined_call_operand.vmem [shape: f32[8,32], index: 0, kind: input, shape index: {}]
  %s1 = inlined_call_operand.hbm [shape: f32[32,128], index: 1, kind: input, shape index: {}]
  %s2 = inlined_call_operand.vmem [shape: f32[128,128], index: 2, kind: input, shape index: {}]
  %s3 = inlined_call_operand.vmem [shape: f32[128,8], index: 3, kind: input, shape index: {}]
  %s4 = inlined_call_operand.vmem [shape: f32[1,264], index: 4, kind: input, shape index: {}]
  %s5 = inlined_call_operand.hbm [shape: f32[8,8], index: 5, kind: output, shape index: {}]
  %s6 = sld [smem:[#allocation0]]
  $region34: #{tpu_custom_call.1} parent=0
    _
  %s8 = ssub.s32 1, %s6
  %s9 = scalar_select 0, %s8, %s6
  $region1: #{tpu_custom_call.1} parent=0
    #allocation2 [shape = 'u8[16384]{0}', space=vmem, size = 0x4000, scoped, tag = 'input window, operand 1, single buffered']
    #allocation3 [shape = 's32[1]{0}', space=sflag, size = 0x4, scoped, tag = 'scoped memory for tpu_custom_call.1']
    #allocation4 [shape = 's32[1]{0}', space=sflag, size = 0x4, scoped, tag = 'scoped memory for tpu_custom_call.1']
    #allocation5 [shape = 'u8[4096]{0}', space=vmem, size = 0x1000, scoped, tag = 'output window, operand 0, single buffered']
    %10 = vsyncpa [#allocation3], 0
    %11 = vsyncpa [#allocation4], 0
    // Predicated region
    $region2: #{tpu_custom_call.1} parent=1 // pred_check
      _
    $region3: #{tpu_custom_call.1} parent=1 // pred_check_branch
      %13 = sbr.rel (0) target = $region5
    $region4: #{tpu_custom_call.1} parent=1 // pred_region
      _
    $region5: #{tpu_custom_call.1} parent=1 // pred_fallthru
      _
    // Predicated region
    $region6: #{tpu_custom_call.1} parent=1 // pred_check
      _
    $region7: #{tpu_custom_call.1} parent=1 // pred_check_branch
      %15 = sbr.rel (0) target = $region9
    $region8: #{tpu_custom_call.1} parent=1 // pred_region
      %s17 = ssub.s32 512, 512
      %18 = vsyncadd [#allocation3], %s17
      %s19 = sshll.u32 [#allocation2], 4
      %s20 = int_to_ptr.vmem [resolvable:$true] %s19
      %25 = dma.hbm_to_vmem [thread:$0]  %s1, 512, %s20, [#allocation3], 128, 128, 8
    $region9: #{tpu_custom_call.1} parent=1 // pred_fallthru
      _
    // Predicated region
    $region10: #{tpu_custom_call.1} parent=1 // pred_check
      _
    $region11: #{tpu_custom_call.1} parent=1 // pred_check_branch
      %27 = sbr.rel (0) target = $region13
    $region12: #{tpu_custom_call.1} parent=1 // pred_region
      _
    $region13: #{tpu_custom_call.1} parent=1 // pred_fallthru
      _
    // Predicated region
    $region14: #{tpu_custom_call.1} parent=1 // pred_check
      _
    $region15: #{tpu_custom_call.1} parent=1 // pred_check_branch
      %29 = sbr.rel (0) target = $region17
    $region16: #{tpu_custom_call.1} parent=1 // pred_region
      _
    $region17: #{tpu_custom_call.1} parent=1 // pred_fallthru
      _
    // Predicated region
    $region18: #{tpu_custom_call.1} parent=1 // pred_check
      _
    $region19: #{tpu_custom_call.1} parent=1 // pred_check_branch
      %31 = sbr.rel (0) target = $region21
    $region20: #{tpu_custom_call.1} parent=1 // pred_region
      _
    $region21: #{tpu_custom_call.1} parent=1 // pred_fallthru
      _
    // Predicated region
    $region22: #{tpu_custom_call.1} parent=1 // pred_check
      _
    $region23: #{tpu_custom_call.1} parent=1 // pred_check_branch
      %33 = sbr.rel (0) target = $region25
    $region24: #{tpu_custom_call.1} parent=1 // pred_region
      %34 = dma.done [#allocation3], 512
    $region25: #{tpu_custom_call.1} parent=1 // pred_fallthru
      _
    %v35 = vld [vmem:[%s4] sm:$0x1]
    %v36 = vld [vmem:[%s4 + $0x1] sm:$0x1]
    %v37 = vld [vmem:[%s4 + $0x2] sm:$0x1]
    %v38 = vld [vmem:[%s0] sm:$0xff]
    %v39 = vld [vmem:[#allocation2] sm:$0xff]
    %v40 = vld [vmem:[#allocation2 + $0x8] sm:$0xff]
    %v41 = vld [vmem:[#allocation2 + $0x10] sm:$0xff]
    %v42 = vld [vmem:[#allocation2 + $0x18] sm:$0xff]
    %v44 = vlaneseq
    %v45 = vshrl.u32 %v44, 7
    %v46 = vsub.s32 0, %v45
    %v47 = vrot.slane %v35, %v46
    %vm49 = vcmask 261120
    %v51 = vsel %vm49, %v38, 0
    %53 = vmatprep.subr.mxu0 0.0
    %54 = vmatpush1.msra.mxu0 %v39
    %55 = vmatprep.subr.mxu0 0.0
    %56 = vmatpush1.msra.mxu0 %v40
    %57 = vmatprep.subr.mxu0 0.0
    %58 = vmatpush1.msra.mxu0 %v41
    %59 = vmatprep.subr.mxu0 0.0
    %60 = vmatpush1.msra.mxu0 %v42
    %61 = vmatprep.subr.mxu0 0.0
    %62 = vmatpush1.msra.mxu0 0.0
    %63 = vmatprep.subr.mxu0 0.0
    %64 = vmatpush1.msra.mxu0 0.0
    %65 = vmatprep.subr.mxu0 0.0
    %66 = vmatpush1.msra.mxu0 0.0
    %67 = vmatprep.subr.mxu0 0.0
    %68 = vmatpush1.msra.mxu0 0.0
    %69 = vmatprep.subr.mxu0 0.0
    %70 = vmatpush1.msra.mxu0 0.0
    %71 = vmatprep.subr.mxu0 0.0
    %72 = vmatpush1.msra.mxu0 0.0
    %73 = vmatprep.subr.mxu0 0.0
    %74 = vmatpush1.msra.mxu0 0.0
    %75 = vmatprep.subr.mxu0 0.0
    %76 = vmatpush1.msra.mxu0 0.0
    %77 = vmatprep.subr.mxu0 0.0
    %78 = vmatpush1.msra.mxu0 0.0
    %79 = vmatprep.subr.mxu0 0.0
    %80 = vmatpush1.msra.mxu0 0.0
    %81 = vmatprep.subr.mxu0 0.0
    %82 = vmatpush1.msra.mxu0 0.0
    %83 = vmatprep.subr.mxu0 0.0
    %84 = vmatpush1.msra.mxu0 0.0
    %85 = vmatprep.subr.mxu0 0.0
    %86 = vmatpush1.msra.mxu0 0.0
    %87 = vmatprep.subr.mxu0 0.0
    %88 = vmatpush1.msra.mxu0 0.0
    %89 = vmatprep.subr.mxu0 0.0
    %90 = vmatpush1.msra.mxu0 0.0
    %91 = vmatprep.subr.mxu0 0.0
    %92 = vmatpush1.msra.mxu0 0.0
    %93 = vmatprep.subr.mxu0 0.0
    %94 = vmatpush1.msra.mxu0 0.0
    %95 = vmatprep.subr.mxu0 0.0
    %96 = vmatpush1.msra.mxu0 0.0
    %97 = vmatprep.subr.mxu0 0.0
    %98 = vmatpush1.msra.mxu0 0.0
    %99 = vmatprep.subr.mxu0 0.0
    %100 = vmatpush1.msra.mxu0 0.0
    %101 = vmatprep.subr.mxu0 0.0
    %102 = vmatpush1.msra.mxu0 0.0
    %103 = vmatprep.subr.mxu0 0.0
    %104 = vmatpush1.msra.mxu0 0.0
    %105 = vmatprep.subr.mxu0 0.0
    %106 = vmatpush1.msra.mxu0 0.0
    %107 = vmatprep.subr.mxu0 0.0
    %108 = vmatpush1.msra.mxu0 0.0
    %109 = vmatprep.subr.mxu0 0.0
    %110 = vmatpush1.msra.mxu0 0.0
    %111 = vmatprep.subr.mxu0 0.0
    %112 = vmatpush1.msra.mxu0 0.0
    %113 = vmatprep.subr.mxu0 0.0
    %114 = vmatpush1.msra.mxu0 0.0
    %115 = vmatprep.subr.mxu0 0.0
    %116 = vmatpush1.msra.mxu0 0.0
    %117 = vmatprep.mubr.f32.mxu0 0.0
    %118 = vmatmul.mubr.f32.gmra.mrb[0].mxu0 %v51
    %v119 = vpop.f32.mrb[0].mxu0
    %v120 = vadd.f32 %v47, %v119
    %v121 = vpop.f32.mrb[0].mxu0
    %122 = vdwg.mxu0
    %v123 = vmax.f32 %v120, 0.0
    %v124 = vld [vmem:[%s2] sm:$0xff]
    %v125 = vld [vmem:[%s2 + $0x8] sm:$0xff]
    %v126 = vld [vmem:[%s2 + $0x10] sm:$0xff]
    %v127 = vld [vmem:[%s2 + $0x18] sm:$0xff]
    %v128 = vld [vmem:[%s2 + $0x20] sm:$0xff]
    %v129 = vld [vmem:[%s2 + $0x28] sm:$0xff]
    %v130 = vld [vmem:[%s2 + $0x30] sm:$0xff]
    %v131 = vld [vmem:[%s2 + $0x38] sm:$0xff]
    %v132 = vld [vmem:[%s2 + $0x40] sm:$0xff]
    %v133 = vld [vmem:[%s2 + $0x48] sm:$0xff]
    %v134 = vld [vmem:[%s2 + $0x50] sm:$0xff]
    %v135 = vld [vmem:[%s2 + $0x58] sm:$0xff]
    %v136 = vld [vmem:[%s2 + $0x60] sm:$0xff]
    %v137 = vld [vmem:[%s2 + $0x68] sm:$0xff]
    %v138 = vld [vmem:[%s2 + $0x70] sm:$0xff]
    %v139 = vld [vmem:[%s2 + $0x78] sm:$0xff]
    %v141 = vlaneseq
    %v142 = vshrl.u32 %v141, 7
    %v143 = vsub.s32 0, %v142
    %v144 = vrot.slane %v36, %v143
    %146 = vmatprep.subr.mxu0 0.0
    %147 = vmatpush1.msra.mxu0 %v124
    %148 = vmatprep.subr.mxu0 0.0
    %149 = vmatpush1.msra.mxu0 %v125
    %150 = vmatprep.subr.mxu0 0.0
    %151 = vmatpush1.msra.mxu0 %v126
    %152 = vmatprep.subr.mxu0 0.0
    %153 = vmatpush1.msra.mxu0 %v127
    %154 = vmatprep.subr.mxu0 0.0
    %155 = vmatpush1.msra.mxu0 %v128
    %156 = vmatprep.subr.mxu0 0.0
    %157 = vmatpush1.msra.mxu0 %v129
    %158 = vmatprep.subr.mxu0 0.0
    %159 = vmatpush1.msra.mxu0 %v130
    %160 = vmatprep.subr.mxu0 0.0
    %161 = vmatpush1.msra.mxu0 %v131
    %162 = vmatprep.subr.mxu0 0.0
    %163 = vmatpush1.msra.mxu0 %v132
    %164 = vmatprep.subr.mxu0 0.0
    %165 = vmatpush1.msra.mxu0 %v133
    %166 = vmatprep.subr.mxu0 0.0
    %167 = vmatpush1.msra.mxu0 %v134
    %168 = vmatprep.subr.mxu0 0.0
    %169 = vmatpush1.msra.mxu0 %v135
    %170 = vmatprep.subr.mxu0 0.0
    %171 = vmatpush1.msra.mxu0 %v136
    %172 = vmatprep.subr.mxu0 0.0
    %173 = vmatpush1.msra.mxu0 %v137
    %174 = vmatprep.subr.mxu0 0.0
    %175 = vmatpush1.msra.mxu0 %v138
    %176 = vmatprep.subr.mxu0 0.0
    %177 = vmatpush1.msra.mxu0 %v139
    %178 = vmatprep.subr.mxu0 0.0
    %179 = vmatpush1.msra.mxu0 0.0
    %180 = vmatprep.subr.mxu0 0.0
    %181 = vmatpush1.msra.mxu0 0.0
    %182 = vmatprep.subr.mxu0 0.0
    %183 = vmatpush1.msra.mxu0 0.0
    %184 = vmatprep.subr.mxu0 0.0
    %185 = vmatpush1.msra.mxu0 0.0
    %186 = vmatprep.subr.mxu0 0.0
    %187 = vmatpush1.msra.mxu0 0.0
    %188 = vmatprep.subr.mxu0 0.0
    %189 = vmatpush1.msra.mxu0 0.0
    %190 = vmatprep.subr.mxu0 0.0
    %191 = vmatpush1.msra.mxu0 0.0
    %192 = vmatprep.subr.mxu0 0.0
    %193 = vmatpush1.msra.mxu0 0.0
    %194 = vmatprep.subr.mxu0 0.0
    %195 = vmatpush1.msra.mxu0 0.0
    %196 = vmatprep.subr.mxu0 0.0
    %197 = vmatpush1.msra.mxu0 0.0
    %198 = vmatprep.subr.mxu0 0.0
    %199 = vmatpush1.msra.mxu0 0.0
    %200 = vmatprep.subr.mxu0 0.0
    %201 = vmatpush1.msra.mxu0 0.0
    %202 = vmatprep.subr.mxu0 0.0
    %203 = vmatpush1.msra.mxu0 0.0
    %204 = vmatprep.subr.mxu0 0.0
    %205 = vmatpush1.msra.mxu0 0.0
    %206 = vmatprep.subr.mxu0 0.0
    %207 = vmatpush1.msra.mxu0 0.0
    %208 = vmatprep.subr.mxu0 0.0
    %209 = vmatpush1.msra.mxu0 0.0
    %210 = vmatprep.mubr.f32.mxu0 0.0
    %211 = vmatmul.mubr.f32.gmra.mrb[0].mxu0 %v123
    %v212 = vpop.f32.mrb[0].mxu0
    %v213 = vadd.f32 %v144, %v212
    %v214 = vpop.f32.mrb[0].mxu0
    %215 = vdwg.mxu0
    %v216 = vmax.f32 %v213, 0.0
    %v217 = vld [vmem:[%s3] sm:$0xff]
    %v218 = vld [vmem:[%s3 + $0x8] sm:$0xff]
    %v219 = vld [vmem:[%s3 + $0x10] sm:$0xff]
    %v220 = vld [vmem:[%s3 + $0x18] sm:$0xff]
    %v221 = vld [vmem:[%s3 + $0x20] sm:$0xff]
    %v222 = vld [vmem:[%s3 + $0x28] sm:$0xff]
    %v223 = vld [vmem:[%s3 + $0x30] sm:$0xff]
    %v224 = vld [vmem:[%s3 + $0x38] sm:$0xff]
    %v225 = vld [vmem:[%s3 + $0x40] sm:$0xff]
    %v226 = vld [vmem:[%s3 + $0x48] sm:$0xff]
    %v227 = vld [vmem:[%s3 + $0x50] sm:$0xff]
    %v228 = vld [vmem:[%s3 + $0x58] sm:$0xff]
    %v229 = vld [vmem:[%s3 + $0x60] sm:$0xff]
    %v230 = vld [vmem:[%s3 + $0x68] sm:$0xff]
    %v231 = vld [vmem:[%s3 + $0x70] sm:$0xff]
    %v232 = vld [vmem:[%s3 + $0x78] sm:$0xff]
    %v234 = vlaneseq
    %v235 = vshrl.u32 %v234, 7
    %v236 = vsub.s32 0, %v235
    %v237 = vrot.slane %v37, %v236
    %239 = vmatprep.subr.mxu0 0.0
    %240 = vmatpush1.msra.mxu0 %v217
    %241 = vmatprep.subr.mxu0 0.0
    %242 = vmatpush1.msra.mxu0 %v218
    %243 = vmatprep.subr.mxu0 0.0
    %244 = vmatpush1.msra.mxu0 %v219
    %245 = vmatprep.subr.mxu0 0.0
    %246 = vmatpush1.msra.mxu0 %v220
    %247 = vmatprep.subr.mxu0 0.0
    %248 = vmatpush1.msra.mxu0 %v221
    %249 = vmatprep.subr.mxu0 0.0
    %250 = vmatpush1.msra.mxu0 %v222
    %251 = vmatprep.subr.mxu0 0.0
    %252 = vmatpush1.msra.mxu0 %v223
    %253 = vmatprep.subr.mxu0 0.0
    %254 = vmatpush1.msra.mxu0 %v224
    %255 = vmatprep.subr.mxu0 0.0
    %256 = vmatpush1.msra.mxu0 %v225
    %257 = vmatprep.subr.mxu0 0.0
    %258 = vmatpush1.msra.mxu0 %v226
    %259 = vmatprep.subr.mxu0 0.0
    %260 = vmatpush1.msra.mxu0 %v227
    %261 = vmatprep.subr.mxu0 0.0
    %262 = vmatpush1.msra.mxu0 %v228
    %263 = vmatprep.subr.mxu0 0.0
    %264 = vmatpush1.msra.mxu0 %v229
    %265 = vmatprep.subr.mxu0 0.0
    %266 = vmatpush1.msra.mxu0 %v230
    %267 = vmatprep.subr.mxu0 0.0
    %268 = vmatpush1.msra.mxu0 %v231
    %269 = vmatprep.subr.mxu0 0.0
    %270 = vmatpush1.msra.mxu0 %v232
    %271 = vmatprep.subr.mxu0 0.0
    %272 = vmatpush1.msra.mxu0 0.0
    %273 = vmatprep.subr.mxu0 0.0
    %274 = vmatpush1.msra.mxu0 0.0
    %275 = vmatprep.subr.mxu0 0.0
    %276 = vmatpush1.msra.mxu0 0.0
    %277 = vmatprep.subr.mxu0 0.0
    %278 = vmatpush1.msra.mxu0 0.0
    %279 = vmatprep.subr.mxu0 0.0
    %280 = vmatpush1.msra.mxu0 0.0
    %281 = vmatprep.subr.mxu0 0.0
    %282 = vmatpush1.msra.mxu0 0.0
    %283 = vmatprep.subr.mxu0 0.0
    %284 = vmatpush1.msra.mxu0 0.0
    %285 = vmatprep.subr.mxu0 0.0
    %286 = vmatpush1.msra.mxu0 0.0
    %287 = vmatprep.subr.mxu0 0.0
    %288 = vmatpush1.msra.mxu0 0.0
    %289 = vmatprep.subr.mxu0 0.0
    %290 = vmatpush1.msra.mxu0 0.0
    %291 = vmatprep.subr.mxu0 0.0
    %292 = vmatpush1.msra.mxu0 0.0
    %293 = vmatprep.subr.mxu0 0.0
    %294 = vmatpush1.msra.mxu0 0.0
    %295 = vmatprep.subr.mxu0 0.0
    %296 = vmatpush1.msra.mxu0 0.0
    %297 = vmatprep.subr.mxu0 0.0
    %298 = vmatpush1.msra.mxu0 0.0
    %299 = vmatprep.subr.mxu0 0.0
    %300 = vmatpush1.msra.mxu0 0.0
    %301 = vmatprep.subr.mxu0 0.0
    %302 = vmatpush1.msra.mxu0 0.0
    %303 = vmatprep.mubr.f32.mxu0 0.0
    %304 = vmatmul.mubr.f32.gmra.mrb[0].mxu0 %v216
    %v305 = vpop.f32.mrb[0].mxu0
    %v306 = vadd.f32 %v237, %v305
    %v307 = vpop.f32.mrb[0].mxu0
    %308 = vdwg.mxu0
    %vm309 = vcmask 64512
    %310 = vst.msk [vmem:[#allocation5] sm:$0xff] %vm309, %v306
    // Predicated region
    $region26: #{tpu_custom_call.1} parent=1 // pred_check
      _
    $region27: #{tpu_custom_call.1} parent=1 // pred_check_branch
      %312 = sbr.rel (0) target = $region29
    $region28: #{tpu_custom_call.1} parent=1 // pred_region
      %s314 = ssub.s32 128, 128
      %315 = vsyncadd [#allocation4], %s314
      %s317 = sshll.u32 [#allocation5], 4
      %s318 = int_to_ptr.vmem [resolvable:$true] %s317
      %320 = dma.vmem_to_hbm [thread:$0]  %s318, 128, %s5, [#allocation4]
    $region29: #{tpu_custom_call.1} parent=1 // pred_fallthru
      _
    // Predicated region
    $region30: #{tpu_custom_call.1} parent=1 // pred_check
      _
    $region31: #{tpu_custom_call.1} parent=1 // pred_check_branch
      %322 = sbr.rel (0) target = $region33
    $region32: #{tpu_custom_call.1} parent=1 // pred_region
      %323 = dma.done [#allocation4], 128
    $region33: #{tpu_custom_call.1} parent=1 // pred_fallthru
      _
    %324 = vsyncpa [#allocation3], 1
    %325 = vsyncpa [#allocation4], 1

</llo_original>
